<compile_context>
chip_gen: v7x
topology: tpu7x:2x2x1
jax: 0.10.0
libtpu: 0.0.40
codegen_flags: <defaults>
</compile_context>

<pallas_src>
import functools

import jax
import jax.numpy as jnp
from jax import lax
from jax.experimental import pallas as pl
from jax.experimental.pallas import tpu as pltpu

_LANE = 128
_SUBLANE = 8


def _round_up(x, m):
    return (x + m - 1) // m * m


def _rnn_seq_kernel(x_ref, h0_ref, w1_ref, b1_ref, w2_ref, b2_ref,
                    out_ref, hid_ref, h_scratch, *, output_size):
    """One (batch_block, timestep) grid point of the fused RNN.

    x_ref:   (1, bb, Ip)      current timestep inputs (padded)
    h0_ref:  (bb, Hp)         initial hidden state (padded)
    w1_ref:  (Ip + Hp, Hp)    [W1x; W1h] pre-concatenated, [in, out] layout
    b1_ref:  (1, Hp)
    w2_ref:  (Hp, Op)
    b2_ref:  (1, Op)
    out_ref: (1, bb, Op)      log-probs for this timestep
    hid_ref: (1, bb, Hp)      hidden state for this timestep
    h_scratch: (bb, Hp)       recurrent hidden state carried across t
    """
    t = pl.program_id(1)

    @pl.when(t == 0)
    def _():
        h_scratch[...] = h0_ref[...]

    x = x_ref[0]                     # (bb, Ip)
    h = h_scratch[...]               # (bb, Hp)
    # Both Ip and Hp are multiples of 128, so this concat is lane-tile aligned.
    combined = jnp.concatenate([x, h], axis=-1)          # (bb, Ip + Hp)

    cdtype = w1_ref.dtype            # f32 by default; bf16 if param_dtype=bf16
    pre = (
        jnp.dot(combined.astype(cdtype), w1_ref[...],
                preferred_element_type=jnp.float32)
        + b1_ref[...]
    )
    hidden = jnp.tanh(pre)           # f32 elementwise (v5e-safe)
    h_scratch[...] = hidden

    logits = (
        jnp.dot(hidden.astype(cdtype), w2_ref[...],
                preferred_element_type=jnp.float32)
        + b2_ref[...]
    )

    # log_softmax over the first `output_size` lanes; the rest is lane padding.
    lane = lax.broadcasted_iota(jnp.int32, logits.shape, 1)
    mask = lane < output_size
    m = jnp.max(jnp.where(mask, logits, -jnp.inf), axis=-1, keepdims=True)
    shifted = logits - m
    ex = jnp.where(mask, jnp.exp(shifted), 0.0)
    lse = jnp.log(jnp.sum(ex, axis=-1, keepdims=True))

    out_ref[0] = (shifted - lse).astype(out_ref.dtype)
    hid_ref[0] = hidden.astype(hid_ref.dtype)


def prep_params(w_i2h, b_i2h, w_i2o, b_i2o,
                input_size, hidden_size, output_size,
                param_dtype=jnp.float32):
    """One-time weight preprocessing (hoisted out of the per-step path).

    Splits the PyTorch i2h weight into its input/hidden parts, transposes to
    [in, out] layout, zero-pads every feature dim to a lane multiple (128) and
    concatenates [W1x; W1h] so the kernel needs a single MXU dot per layer.
    Optionally stores the matmul weights in bf16 (v6e/v7x); biases stay f32.
    """
    Ip = _round_up(input_size, _LANE)
    Hp = _round_up(hidden_size, _LANE)
    Op = _round_up(output_size, _LANE)

    w1x = jnp.transpose(w_i2h[:, :input_size])           # (input, hidden)
    w1h = jnp.transpose(w_i2h[:, input_size:])           # (hidden, hidden)
    w1x = jnp.pad(w1x, ((0, Ip - input_size), (0, Hp - hidden_size)))
    w1h = jnp.pad(w1h, ((0, Hp - hidden_size), (0, Hp - hidden_size)))
    w1 = jnp.concatenate([w1x, w1h], axis=0).astype(param_dtype)   # (Ip+Hp, Hp)

    b1 = jnp.pad(b_i2h, (0, Hp - hidden_size)).reshape(1, Hp).astype(jnp.float32)
    w2 = jnp.pad(jnp.transpose(w_i2o),
                 ((0, Hp - hidden_size), (0, Op - output_size))).astype(param_dtype)
    b2 = jnp.pad(b_i2o, (0, Op - output_size)).reshape(1, Op).astype(jnp.float32)

    return dict(w1=w1, b1=b1, w2=w2, b2=b2,
                input_size=int(input_size), hidden_size=int(hidden_size),
                output_size=int(output_size), Ip=Ip, Hp=Hp, Op=Op)


def rnn_sequence(params, xs, h0):
    """Run the RNN cell over a whole sequence in ONE fused pallas_call.

    xs: (T, B, input_size)   h0: (B, hidden_size)
    Returns (log_probs (T, B, output_size), hidden_states (T, B, hidden_size)).
    """
    T, B, input_size = xs.shape
    hidden_size = params["hidden_size"]
    output_size = params["output_size"]
    Ip, Hp, Op = params["Ip"], params["Hp"], params["Op"]
    assert input_size == params["input_size"]
    assert h0.shape == (B, hidden_size)

    # Pad batch to a sublane multiple; tile it so the batch grid axis can be
    # sharded across TensorCores (megacore / v7x).
    Bp = _round_up(B, _SUBLANE)
    bb = Bp if Bp <= 128 else 128
    Bp = _round_up(Bp, bb)
    nb = Bp // bb

    xs_p = jnp.pad(xs.astype(jnp.float32),
                   ((0, 0), (0, Bp - B), (0, Ip - input_size)))
    h0_p = jnp.pad(h0.astype(jnp.float32),
                   ((0, Bp - B), (0, Hp - hidden_size)))

    w1, b1, w2, b2 = params["w1"], params["b1"], params["w2"], params["b2"]

    flops = 2 * T * Bp * (Ip + Hp) * Hp + 2 * T * Bp * Hp * Op
    transcendentals = T * Bp * (Hp + Op)
    bytes_accessed = (
        xs_p.size * 4 + h0_p.size * 4
        + w1.size * w1.dtype.itemsize + w2.size * w2.dtype.itemsize
        + b1.size * 4 + b2.size * 4
        + T * Bp * (Op + Hp) * 4
    )

    kernel = functools.partial(_rnn_seq_kernel, output_size=output_size)

    out_p, hid_p = pl.pallas_call(
        kernel,
        out_shape=(
            jax.ShapeDtypeStruct((T, Bp, Op), jnp.float32),
            jax.ShapeDtypeStruct((T, Bp, Hp), jnp.float32),
        ),
        grid=(nb, T),
        in_specs=[
            pl.BlockSpec((1, bb, Ip), lambda b, t: (t, b, 0)),     # x_t streamed
            pl.BlockSpec((bb, Hp), lambda b, t: (b, 0)),           # h0
            pl.BlockSpec((Ip + Hp, Hp), lambda b, t: (0, 0)),      # W1 (resident)
            pl.BlockSpec((1, Hp), lambda b, t: (0, 0)),            # b1
            pl.BlockSpec((Hp, Op), lambda b, t: (0, 0)),           # W2 (resident)
            pl.BlockSpec((1, Op), lambda b, t: (0, 0)),            # b2
        ],
        out_specs=(
            pl.BlockSpec((1, bb, Op), lambda b, t: (t, b, 0)),
            pl.BlockSpec((1, bb, Hp), lambda b, t: (t, b, 0)),
        ),
        scratch_shapes=[pltpu.VMEM((bb, Hp), jnp.float32)],        # recurrent h
        compiler_params=pltpu.CompilerParams(
            dimension_semantics=("parallel", "arbitrary")),
        cost_estimate=pl.CostEstimate(flops=flops,
                                      transcendentals=transcendentals,
                                      bytes_accessed=bytes_accessed),
    )(xs_p, h0_p, w1, b1, w2, b2)

    return out_p[:, :B, :output_size], hid_p[:, :B, :hidden_size]


def rnn_forward(params, x, h):
    """Single-step forward matching the PyTorch module: returns (output, hidden)."""
    out_seq, hid_seq = rnn_sequence(params, x[None], h)
    return out_seq[0], hid_seq[0]


def init_hidden(params, batch=1):
    return jnp.zeros((batch, params["hidden_size"]), jnp.float32)


if __name__ == "__main__":
    B = 2
    input_size = 32
    hidden_size = 32
    output_size = 16
    T = 8

    key = jax.random.PRNGKey(0)
    k1, k2, k3, k4, k5, k6 = jax.random.split(key, 6)

    xs = jax.random.normal(k1, (T, B, input_size), dtype=jnp.float32)
    h0 = jax.random.normal(k2, (B, hidden_size), dtype=jnp.float32)

    # Deterministic parameters (PyTorch nn.Linear shapes).
    w_i2h = 0.1 * jax.random.normal(
        k3, (hidden_size, input_size + hidden_size), dtype=jnp.float32)
    b_i2h = 0.1 * jax.random.normal(k4, (hidden_size,), dtype=jnp.float32)
    w_i2o = 0.1 * jax.random.normal(
        k5, (output_size, hidden_size), dtype=jnp.float32)
    b_i2o = 0.1 * jax.random.normal(k6, (output_size,), dtype=jnp.float32)

    # One-time weight preprocessing (hoisted out of the step path).
    params = prep_params(w_i2h, b_i2h, w_i2o, b_i2o,
                         input_size, hidden_size, output_size)

    # Single-step (original module forward semantics).
    out1, hid1 = rnn_forward(params, xs[0], h0)
    # Fused full-sequence kernel (T timesteps in one pallas_call).
    out_seq, hid_seq = rnn_sequence(params, xs, h0)
    jax.block_until_ready((out1, hid1, out_seq, hid_seq))

    # Pure-JAX reference (identical math to the PyTorch module).
    def step_ref(x, h):
        combined = jnp.concatenate([x, h], axis=1)
        hidden = jnp.tanh(combined @ w_i2h.T + b_i2h)
        logits = hidden @ w_i2o.T + b_i2o
        return jax.nn.log_softmax(logits, axis=-1), hidden

    ref_out1, ref_hid1 = step_ref(xs[0], h0)
    assert jnp.allclose(out1, ref_out1, atol=1e-5, rtol=1e-5), "step output mismatch"
    assert jnp.allclose(hid1, ref_hid1, atol=1e-5, rtol=1e-5), "step hidden mismatch"

    h = h0
    ref_outs, ref_hids = [], []
    for t in range(T):
        o, h = step_ref(xs[t], h)
        ref_outs.append(o)
        ref_hids.append(h)
    ref_outs = jnp.stack(ref_outs)
    ref_hids = jnp.stack(ref_hids)
    assert jnp.allclose(out_seq, ref_outs, atol=1e-4, rtol=1e-4), "seq output mismatch"
    assert jnp.allclose(hid_seq, ref_hids, atol=1e-4, rtol=1e-4), "seq hidden mismatch"

    print("KERNEL_OK")
</pallas_src>

<mosaic_0001>
module attributes {stable_mosaic.version = 11 : i64} {
  func.func @_rnn_seq_kernel(%arg0: i32, %arg1: i32, %arg2: memref<1x8x128xf32, #tpu.memory_space<vmem>>, %arg3: memref<8x128xf32, #tpu.memory_space<vmem>>, %arg4: memref<256x128xf32, #tpu.memory_space<vmem>>, %arg5: memref<1x128xf32, #tpu.memory_space<vmem>>, %arg6: memref<128x128xf32, #tpu.memory_space<vmem>>, %arg7: memref<1x128xf32, #tpu.memory_space<vmem>>, %arg8: memref<1x8x128xf32, #tpu.memory_space<vmem>>, %arg9: memref<1x8x128xf32, #tpu.memory_space<vmem>>, %arg10: memref<8x128xf32, #tpu.memory_space<vmem>>) attributes {dimension_semantics = [#tpu.dimension_semantics<parallel>, #tpu.dimension_semantics<arbitrary>], iteration_bounds = array<i64: 1, 1>, scalar_prefetch = 0 : i64, scratch_operands = 1 : i64, tpu.core_type = #tpu.core_type<tc>, window_params = [{transform_indices = @transform_0, window_bounds = array<i64: 1, 8, 128>}, {transform_indices = @transform_1, window_bounds = array<i64: 8, 128>}, {pipeline_mode = #tpu.pipeline_mode<synchronous>, transform_indices = @transform_2, window_bounds = array<i64: 256, 128>}, {pipeline_mode = #tpu.pipeline_mode<synchronous>, transform_indices = @transform_3, window_bounds = array<i64: 1, 128>}, {pipeline_mode = #tpu.pipeline_mode<synchronous>, transform_indices = @transform_4, window_bounds = array<i64: 128, 128>}, {pipeline_mode = #tpu.pipeline_mode<synchronous>, transform_indices = @transform_5, window_bounds = array<i64: 1, 128>}, {transform_indices = @transform_6, window_bounds = array<i64: 1, 8, 128>}, {transform_indices = @transform_7, window_bounds = array<i64: 1, 8, 128>}]} {
    %c0_i32 = arith.constant 0 : i32
    %0 = arith.cmpi eq, %arg1, %c0_i32 : i32
    %1 = arith.extui %0 : i1 to i32
    %c0_i32_0 = arith.constant 0 : i32
    %2 = arith.cmpi ne, %1, %c0_i32_0 : i32
    scf.if %2 {
      %c0_26 = arith.constant 0 : index
      %c0_27 = arith.constant 0 : index
      %42 = vector.load %arg3[%c0_26, %c0_27] : memref<8x128xf32, #tpu.memory_space<vmem>>, vector<8x128xf32>
      %c0_28 = arith.constant 0 : index
      %c0_29 = arith.constant 0 : index
      %43 = vector.load %arg10[%c0_28, %c0_29] : memref<8x128xf32, #tpu.memory_space<vmem>>, vector<8x128xf32>
      tpu.vector_store %arg10[%c0_28, %c0_29], %42 {strides = array<i32>} : memref<8x128xf32, #tpu.memory_space<vmem>>, vector<8x128xf32>,
    } else {
    }
    %c0 = arith.constant 0 : index
    %c0_1 = arith.constant 0 : index
    %c0_2 = arith.constant 0 : index
    %3 = vector.load %arg2[%c0, %c0_1, %c0_2] : memref<1x8x128xf32, #tpu.memory_space<vmem>>, vector<1x8x128xf32>
    %4 = vector.shape_cast %3 : vector<1x8x128xf32> to vector<8x128xf32>
    %c0_3 = arith.constant 0 : index
    %c0_4 = arith.constant 0 : index
    %5 = vector.load %arg10[%c0_3, %c0_4] : memref<8x128xf32, #tpu.memory_space<vmem>>, vector<8x128xf32>
    %6 = tpu.concatenate %4, %5 in 1 : vector<8x128xf32>, vector<8x128xf32> -> vector<8x256xf32>
    %c0_5 = arith.constant 0 : index
    %c0_6 = arith.constant 0 : index
    %7 = vector.load %arg4[%c0_5, %c0_6] : memref<256x128xf32, #tpu.memory_space<vmem>>, vector<256x128xf32>
    %cst = arith.constant dense<0.000000e+00> : vector<8x128xf32>
    %8 = tpu.matmul %6, %7, %cst {dimension_numbers = #tpu.dot_dimension_numbers<[1], [0], [0], [1], [0, 0, 1, 1], [], []>} : vector<8x256xf32>, vector<256x128xf32>, vector<8x128xf32> -> vector<8x128xf32>
    %c0_7 = arith.constant 0 : index
    %c0_8 = arith.constant 0 : index
    %9 = vector.load %arg5[%c0_7, %c0_8] : memref<1x128xf32, #tpu.memory_space<vmem>>, vector<1x128xf32>
    %10 = vector.broadcast %9 : vector<1x128xf32> to vector<8x128xf32>
    %11 = arith.addf %8, %10 : vector<8x128xf32>
    %12 = math.tanh %11 : vector<8x128xf32>
    %c0_9 = arith.constant 0 : index
    %c0_10 = arith.constant 0 : index
    %13 = vector.load %arg10[%c0_9, %c0_10] : memref<8x128xf32, #tpu.memory_space<vmem>>, vector<8x128xf32>
    tpu.vector_store %arg10[%c0_9, %c0_10], %12 {strides = array<i32>} : memref<8x128xf32, #tpu.memory_space<vmem>>, vector<8x128xf32>,
    %c0_11 = arith.constant 0 : index
    %c0_12 = arith.constant 0 : index
    %14 = vector.load %arg6[%c0_11, %c0_12] : memref<128x128xf32, #tpu.memory_space<vmem>>, vector<128x128xf32>
    %cst_13 = arith.constant dense<0.000000e+00> : vector<8x128xf32>
    %15 = tpu.matmul %12, %14, %cst_13 {dimension_numbers = #tpu.dot_dimension_numbers<[1], [0], [0], [1], [0, 0, 1, 1], [], []>} : vector<8x128xf32>, vector<128x128xf32>, vector<8x128xf32> -> vector<8x128xf32>
    %c0_14 = arith.constant 0 : index
    %c0_15 = arith.constant 0 : index
    %16 = vector.load %arg7[%c0_14, %c0_15] : memref<1x128xf32, #tpu.memory_space<vmem>>, vector<1x128xf32>
    %17 = vector.broadcast %16 : vector<1x128xf32> to vector<8x128xf32>
    %18 = arith.addf %15, %17 : vector<8x128xf32>
    %19 = tpu.iota {dimensions = array<i32: 1>} : vector<8x128xi32>
    %c16_i32 = arith.constant 16 : i32
    %20 = vector.broadcast %c16_i32 : i32 to vector<8x128xi32>
    %21 = arith.cmpi slt, %19, %20 : vector<8x128xi32>
    %cst_16 = arith.constant 0xFF800000 : f32
    %22 = vector.broadcast %cst_16 : f32 to vector<8x128xf32>
    %23 = arith.select %21, %18, %22 : vector<8x128xi1>, vector<8x128xf32>
    %cst_17 = arith.constant dense<0xFF800000> : vector<8xf32>
    %24 = vector.multi_reduction <maximumf>, %23, %cst_17 [1] : vector<8x128xf32> to vector<8xf32>
    %25 = vector.shape_cast %24 : vector<8xf32> to vector<8x1xf32>
    %26 = vector.broadcast %25 : vector<8x1xf32> to vector<8x128xf32>
    %27 = arith.subf %18, %26 : vector<8x128xf32>
    %28 = math.exp %27 : vector<8x128xf32>
    %cst_18 = arith.constant 0.000000e+00 : f32
    %29 = vector.broadcast %cst_18 : f32 to vector<8x128xf32>
    %30 = arith.select %21, %28, %29 : vector<8x128xi1>, vector<8x128xf32>
    %cst_19 = arith.constant dense<0.000000e+00> : vector<8xf32>
    %31 = vector.multi_reduction <add>, %30, %cst_19 [1] : vector<8x128xf32> to vector<8xf32>
    %32 = vector.shape_cast %31 : vector<8xf32> to vector<8x1xf32>
    %33 = math.log %32 : vector<8x1xf32>
    %34 = vector.broadcast %33 : vector<8x1xf32> to vector<8x128xf32>
    %35 = arith.subf %27, %34 : vector<8x128xf32>
    %c0_20 = arith.constant 0 : index
    %c0_21 = arith.constant 0 : index
    %c0_22 = arith.constant 0 : index
    %36 = vector.load %arg8[%c0_20, %c0_21, %c0_22] : memref<1x8x128xf32, #tpu.memory_space<vmem>>, vector<1x8x128xf32>
    %37 = vector.shape_cast %36 : vector<1x8x128xf32> to vector<8x128xf32>
    %38 = vector.shape_cast %35 : vector<8x128xf32> to vector<1x8x128xf32>
    tpu.vector_store %arg8[%c0_20, %c0_21, %c0_22], %38 {strides = array<i32>} : memref<1x8x128xf32, #tpu.memory_space<vmem>>, vector<1x8x128xf32>,
    %c0_23 = arith.constant 0 : index
    %c0_24 = arith.constant 0 : index
    %c0_25 = arith.constant 0 : index
    %39 = vector.load %arg9[%c0_23, %c0_24, %c0_25] : memref<1x8x128xf32, #tpu.memory_space<vmem>>, vector<1x8x128xf32>
    %40 = vector.shape_cast %39 : vector<1x8x128xf32> to vector<8x128xf32>
    %41 = vector.shape_cast %12 : vector<8x128xf32> to vector<1x8x128xf32>
    tpu.vector_store %arg9[%c0_23, %c0_24, %c0_25], %41 {strides = array<i32>} : memref<1x8x128xf32, #tpu.memory_space<vmem>>, vector<1x8x128xf32>,
    return
  }
  func.func @transform_0(%arg0: i32, %arg1: i32) -> (i32, i32, i32) {
    %c0_i32 = arith.constant 0 : i32
    %c0_i32_0 = arith.constant 0 : i32
    return %arg1, %arg0, %c0_i32 : i32, i32, i32
  }
  func.func @transform_1(%arg0: i32, %arg1: i32) -> (i32, i32) {
    %c0_i32 = arith.constant 0 : i32
    %c0_i32_0 = arith.constant 0 : i32
    return %arg0, %c0_i32 : i32, i32
  }
  func.func @transform_2(%arg0: i32, %arg1: i32) -> (i32, i32) {
    %c0_i32 = arith.constant 0 : i32
    %c0_i32_0 = arith.constant 0 : i32
    %c0_i32_1 = arith.constant 0 : i32
    return %c0_i32, %c0_i32_0 : i32, i32
  }
  func.func @transform_3(%arg0: i32, %arg1: i32) -> (i32, i32) {
    %c0_i32 = arith.constant 0 : i32
    %c0_i32_0 = arith.constant 0 : i32
    %c0_i32_1 = arith.constant 0 : i32
    return %c0_i32, %c0_i32_0 : i32, i32
  }
  func.func @transform_4(%arg0: i32, %arg1: i32) -> (i32, i32) {
    %c0_i32 = arith.constant 0 : i32
    %c0_i32_0 = arith.constant 0 : i32
    %c0_i32_1 = arith.constant 0 : i32
    return %c0_i32, %c0_i32_0 : i32, i32
  }
  func.func @transform_5(%arg0: i32, %arg1: i32) -> (i32, i32) {
    %c0_i32 = arith.constant 0 : i32
    %c0_i32_0 = arith.constant 0 : i32
    %c0_i32_1 = arith.constant 0 : i32
    return %c0_i32, %c0_i32_0 : i32, i32
  }
  func.func @transform_6(%arg0: i32, %arg1: i32) -> (i32, i32, i32) {
    %c0_i32 = arith.constant 0 : i32
    %c0_i32_0 = arith.constant 0 : i32
    return %arg1, %arg0, %c0_i32 : i32, i32, i32
  }
  func.func @transform_7(%arg0: i32, %arg1: i32) -> (i32, i32, i32) {
    %c0_i32 = arith.constant 0 : i32
    %c0_i32_0 = arith.constant 0 : i32
    return %arg1, %arg0, %c0_i32 : i32, i32, i32
  }
}

</mosaic_0001>

<llo_original>
// kernel: tpu_custom_call.1
$region0: #{tpu_custom_call.1}
  #allocation0 [shape = 'u32[]', space=smem, size = 0x4, offset = 0x4, fixed_abs, tag = 'smem constant byte address 0x4 - core index']
  #allocation1 [shape = 'u32[144,128]{1,0:T(1,128)}', space=vmem, size = 0x12000, scoped, tag = 'internal scratch']
  #allocation2 [shape = 'f32[8,128]{1,0:T(8,128)}', space=vmem, size = 0x1000, scoped, tag = 'scratch operand']
  %s0 = inlined_call_operand.hbm [shape: f32[1,8,128], index: 0, kind: input, shape index: {}]
  %s1 = inlined_call_operand.hbm [shape: f32[8,128], index: 1, kind: input, shape index: {}]
  %s2 = inlined_call_operand.hbm [shape: f32[256,128], index: 2, kind: input, shape index: {}]
  %s3 = inlined_call_operand.vmem [shape: f32[1,128], index: 3, kind: input, shape index: {}]
  %s4 = inlined_call_operand.hbm [shape: f32[128,128], index: 4, kind: input, shape index: {}]
  %s5 = inlined_call_operand.vmem [shape: f32[1,128], index: 5, kind: input, shape index: {}]
  %s6 = inlined_call_operand.hbm [shape: f32[1,8,128], index: 6, kind: output, shape index: {0}]
  %s7 = inlined_call_operand.hbm [shape: f32[1,8,128], index: 7, kind: output, shape index: {1}]
  %8 = xla_tuple %s6, %s7
  %s9 = sld [smem:[#allocation0]]
  $region62: #{tpu_custom_call.1} parent=0
    _
  %s11 = ssub.s32 1, %s9
  %s12 = scalar_select 0, %s11, %s9
  $region1: #{tpu_custom_call.1} parent=0
    #allocation3 [shape = 'u8[4096]{0}', space=vmem, size = 0x1000, scoped, tag = 'input window, operand 0, single buffered']
    #allocation4 [shape = 's32[1]{0}', space=sflag, size = 0x4, scoped, tag = 'scoped memory for tpu_custom_call.1']
    #allocation5 [shape = 's32[1]{0}', space=sflag, size = 0x4, scoped, tag = 'scoped memory for tpu_custom_call.1']
    #allocation6 [shape = 'u8[4096]{0}', space=vmem, size = 0x1000, scoped, tag = 'input window, operand 1, single buffered']
    #allocation7 [shape = 's32[1]{0}', space=sflag, size = 0x4, scoped, tag = 'scoped memory for tpu_custom_call.1']
    #allocation8 [shape = 'u8[131072]{0}', space=vmem, size = 0x20000, scoped, tag = 'input window, operand 2, single buffered']
    #allocation9 [shape = 'u8[65536]{0}', space=vmem, size = 0x10000, scoped, tag = 'input window, operand 4, single buffered']
    #allocation10 [shape = 's32[1]{0}', space=sflag, size = 0x4, scoped, tag = 'scoped memory for tpu_custom_call.1']
    #allocation11 [shape = 'u8[4096]{0}', space=vmem, size = 0x1000, scoped, tag = 'output window, operand 0, single buffered']
    #allocation12 [shape = 'u8[4096]{0}', space=vmem, size = 0x1000, scoped, tag = 'output window, operand 1, single buffered']
    #allocation13 [shape = 's32[1]{0}', space=sflag, size = 0x4, scoped, tag = 'scoped memory for tpu_custom_call.1']
    %13 = vsyncpa [#allocation4], 0
    %14 = vsyncpa [#allocation7], 0
    %15 = vsyncpa [#allocation10], 0
    %16 = vsyncpa [#allocation5], 0
    %17 = vsyncpa [#allocation13], 0
    // Predicated region
    $region2: #{tpu_custom_call.1} parent=1 // pred_check
      _
    $region3: #{tpu_custom_call.1} parent=1 // pred_check_branch
      %19 = sbr.rel (0) target = $region5
    $region4: #{tpu_custom_call.1} parent=1 // pred_region
      %s21 = ssub.s32 128, 128
      %22 = vsyncadd [#allocation4], %s21
      %s24 = sshll.u32 [#allocation3], 4
      %s25 = int_to_ptr.vmem [resolvable:$true] %s24
      %27 = dma.hbm_to_vmem [thread:$0]  %s0, 128, %s25, [#allocation4]
    $region5: #{tpu_custom_call.1} parent=1 // pred_fallthru
      _
    // Predicated region
    $region6: #{tpu_custom_call.1} parent=1 // pred_check
      _
    $region7: #{tpu_custom_call.1} parent=1 // pred_check_branch
      %29 = sbr.rel (0) target = $region9
    $region8: #{tpu_custom_call.1} parent=1 // pred_region
      %s31 = ssub.s32 128, 128
      %32 = vsyncadd [#allocation7], %s31
      %s34 = sshll.u32 [#allocation6], 4
      %s35 = int_to_ptr.vmem [resolvable:$true] %s34
      %37 = dma.hbm_to_vmem [thread:$0]  %s1, 128, %s35, [#allocation7]
    $region9: #{tpu_custom_call.1} parent=1 // pred_fallthru
      _
    // Predicated region
    $region10: #{tpu_custom_call.1} parent=1 // pred_check
      _
    $region11: #{tpu_custom_call.1} parent=1 // pred_check_branch
      %39 = sbr.rel (0) target = $region13
    $region12: #{tpu_custom_call.1} parent=1 // pred_region
      %s41 = ssub.s32 4096, 4096
      %42 = vsyncadd [#allocation7], %s41
      %s43 = sshll.u32 [#allocation8], 4
      %s44 = int_to_ptr.vmem [resolvable:$true] %s43
      %49 = dma.hbm_to_vmem [thread:$0]  %s2, 4096, %s44, [#allocation7], 128, 128, 8
    $region13: #{tpu_custom_call.1} parent=1 // pred_fallthru
      _
    // Predicated region
    $region14: #{tpu_custom_call.1} parent=1 // pred_check
      _
    $region15: #{tpu_custom_call.1} parent=1 // pred_check_branch
      %51 = sbr.rel (0) target = $region17
    $region16: #{tpu_custom_call.1} parent=1 // pred_region
      _
    $region17: #{tpu_custom_call.1} parent=1 // pred_fallthru
      _
    // Predicated region
    $region18: #{tpu_custom_call.1} parent=1 // pred_check
      _
    $region19: #{tpu_custom_call.1} parent=1 // pred_check_branch
      %53 = sbr.rel (0) target = $region21
    $region20: #{tpu_custom_call.1} parent=1 // pred_region
      %s55 = ssub.s32 2048, 2048
      %56 = vsyncadd [#allocation10], %s55
      %s57 = sshll.u32 [#allocation9], 4
      %s58 = int_to_ptr.vmem [resolvable:$true] %s57
      %63 = dma.hbm_to_vmem [thread:$0]  %s4, 2048, %s58, [#allocation10], 128, 128, 8
    $region21: #{tpu_custom_call.1} parent=1 // pred_fallthru
      _
    // Predicated region
    $region22: #{tpu_custom_call.1} parent=1 // pred_check
      _
    $region23: #{tpu_custom_call.1} parent=1 // pred_check_branch
      %65 = sbr.rel (0) target = $region25
    $region24: #{tpu_custom_call.1} parent=1 // pred_region
      _
    $region25: #{tpu_custom_call.1} parent=1 // pred_fallthru
      _
    // Predicated region
    $region26: #{tpu_custom_call.1} parent=1 // pred_check
      _
    $region27: #{tpu_custom_call.1} parent=1 // pred_check_branch
      %67 = sbr.rel (0) target = $region29
    $region28: #{tpu_custom_call.1} parent=1 // pred_region
      %68 = dma.done [#allocation4], 128
    $region29: #{tpu_custom_call.1} parent=1 // pred_fallthru
      _
    // Predicated region
    $region30: #{tpu_custom_call.1} parent=1 // pred_check
      _
    $region31: #{tpu_custom_call.1} parent=1 // pred_check_branch
      %70 = sbr.rel (0) target = $region33
    $region32: #{tpu_custom_call.1} parent=1 // pred_region
      %71 = dma.done [#allocation7], 128
    $region33: #{tpu_custom_call.1} parent=1 // pred_fallthru
      _
    // Predicated region
    $region34: #{tpu_custom_call.1} parent=1 // pred_check
      _
    $region35: #{tpu_custom_call.1} parent=1 // pred_check_branch
      %73 = sbr.rel (0) target = $region37
    $region36: #{tpu_custom_call.1} parent=1 // pred_region
      %74 = dma.done [#allocation7], 4096
    $region37: #{tpu_custom_call.1} parent=1 // pred_fallthru
      _
    // Predicated region
    $region38: #{tpu_custom_call.1} parent=1 // pred_check
      _
    $region39: #{tpu_custom_call.1} parent=1 // pred_check_branch
      %76 = sbr.rel (0) target = $region41
    $region40: #{tpu_custom_call.1} parent=1 // pred_region
      %77 = dma.done [#allocation10], 2048
    $region41: #{tpu_custom_call.1} parent=1 // pred_fallthru
      _
    %p78 = scmp.eq.s32.totalorder 0, 0
    // Predicated region
    $region42: #{tpu_custom_call.1} parent=1 // pred_check
      %p79 = pneg %p78
    $region43: #{tpu_custom_call.1} parent=1 // pred_check_branch
      %81 = sbr.rel (%p79) target = $region45
    $region44: #{tpu_custom_call.1} parent=1 // pred_region
      %v82 = vld [vmem:[#allocation6] sm:$0xff]
      %83 = vst [vmem:[#allocation2] sm:$0xff] %v82
    $region45: #{tpu_custom_call.1} parent=1 // pred_fallthru
      _
    %v84 = vld [vmem:[#allocation3] sm:$0xff]
    %v85 = vld [vmem:[#allocation2] sm:$0xff]
    %v86 = vld [vmem:[#allocation8] sm:$0xff]
    %v87 = vld [vmem:[#allocation8 + $0x8] sm:$0xff]
    %v88 = vld [vmem:[#allocation8 + $0x10] sm:$0xff]
    %v89 = vld [vmem:[#allocation8 + $0x18] sm:$0xff]
    %v90 = vld [vmem:[#allocation8 + $0x20] sm:$0xff]
    %v91 = vld [vmem:[#allocation8 + $0x28] sm:$0xff]
    %v92 = vld [vmem:[#allocation8 + $0x30] sm:$0xff]
    %v93 = vld [vmem:[#allocation8 + $0x38] sm:$0xff]
    %v94 = vld [vmem:[#allocation8 + $0x40] sm:$0xff]
    %v95 = vld [vmem:[#allocation8 + $0x48] sm:$0xff]
    %v96 = vld [vmem:[#allocation8 + $0x50] sm:$0xff]
    %v97 = vld [vmem:[#allocation8 + $0x58] sm:$0xff]
    %v98 = vld [vmem:[#allocation8 + $0x60] sm:$0xff]
    %v99 = vld [vmem:[#allocation8 + $0x68] sm:$0xff]
    %v100 = vld [vmem:[#allocation8 + $0x70] sm:$0xff]
    %v101 = vld [vmem:[#allocation8 + $0x78] sm:$0xff]
    %v102 = vld [vmem:[#allocation8 + $0x80] sm:$0xff]
    %v103 = vld [vmem:[#allocation8 + $0x88] sm:$0xff]
    %v104 = vld [vmem:[#allocation8 + $0x90] sm:$0xff]
    %v105 = vld [vmem:[#allocation8 + $0x98] sm:$0xff]
    %v106 = vld [vmem:[#allocation8 + $0xa0] sm:$0xff]
    %v107 = vld [vmem:[#allocation8 + $0xa8] sm:$0xff]
    %v108 = vld [vmem:[#allocation8 + $0xb0] sm:$0xff]
    %v109 = vld [vmem:[#allocation8 + $0xb8] sm:$0xff]
    %v110 = vld [vmem:[#allocation8 + $0xc0] sm:$0xff]
    %v111 = vld [vmem:[#allocation8 + $0xc8] sm:$0xff]
    %v112 = vld [vmem:[#allocation8 + $0xd0] sm:$0xff]
    %v113 = vld [vmem:[#allocation8 + $0xd8] sm:$0xff]
    %v114 = vld [vmem:[#allocation8 + $0xe0] sm:$0xff]
    %v115 = vld [vmem:[#allocation8 + $0xe8] sm:$0xff]
    %v116 = vld [vmem:[#allocation8 + $0xf0] sm:$0xff]
    %v117 = vld [vmem:[#allocation8 + $0xf8] sm:$0xff]
    %v118 = vld [vmem:[%s3] sm:$0x1]
    %v120 = vlaneseq
    %v121 = vshrl.u32 %v120, 7
    %v122 = vsub.s32 0, %v121
    %v123 = vrot.slane %v118, %v122
    %125 = vmatprep.subr.mxu0 0.0
    %126 = vmatpush1.msra.mxu0 %v86
    %127 = vmatprep.subr.mxu0 0.0
    %128 = vmatpush1.msra.mxu0 %v87
    %129 = vmatprep.subr.mxu0 0.0
    %130 = vmatpush1.msra.mxu0 %v88
    %131 = vmatprep.subr.mxu0 0.0
    %132 = vmatpush1.msra.mxu0 %v89
    %133 = vmatprep.subr.mxu0 0.0
    %134 = vmatpush1.msra.mxu0 %v90
    %135 = vmatprep.subr.mxu0 0.0
    %136 = vmatpush1.msra.mxu0 %v91
    %137 = vmatprep.subr.mxu0 0.0
    %138 = vmatpush1.msra.mxu0 %v92
    %139 = vmatprep.subr.mxu0 0.0
    %140 = vmatpush1.msra.mxu0 %v93
    %141 = vmatprep.subr.mxu0 0.0
    %142 = vmatpush1.msra.mxu0 %v94
    %143 = vmatprep.subr.mxu0 0.0
    %144 = vmatpush1.msra.mxu0 %v95
    %145 = vmatprep.subr.mxu0 0.0
    %146 = vmatpush1.msra.mxu0 %v96
    %147 = vmatprep.subr.mxu0 0.0
    %148 = vmatpush1.msra.mxu0 %v97
    %149 = vmatprep.subr.mxu0 0.0
    %150 = vmatpush1.msra.mxu0 %v98
    %151 = vmatprep.subr.mxu0 0.0
    %152 = vmatpush1.msra.mxu0 %v99
    %153 = vmatprep.subr.mxu0 0.0
    %154 = vmatpush1.msra.mxu0 %v100
    %155 = vmatprep.subr.mxu0 0.0
    %156 = vmatpush1.msra.mxu0 %v101
    %157 = vmatprep.subr.mxu0 0.0
    %158 = vmatpush1.msra.mxu0 %v102
    %159 = vmatprep.subr.mxu0 0.0
    %160 = vmatpush1.msra.mxu0 %v103
    %161 = vmatprep.subr.mxu0 0.0
    %162 = vmatpush1.msra.mxu0 %v104
    %163 = vmatprep.subr.mxu0 0.0
    %164 = vmatpush1.msra.mxu0 %v105
    %165 = vmatprep.subr.mxu0 0.0
    %166 = vmatpush1.msra.mxu0 %v106
    %167 = vmatprep.subr.mxu0 0.0
    %168 = vmatpush1.msra.mxu0 %v107
    %169 = vmatprep.subr.mxu0 0.0
    %170 = vmatpush1.msra.mxu0 %v108
    %171 = vmatprep.subr.mxu0 0.0
    %172 = vmatpush1.msra.mxu0 %v109
    %173 = vmatprep.subr.mxu0 0.0
    %174 = vmatpush1.msra.mxu0 %v110
    %175 = vmatprep.subr.mxu0 0.0
    %176 = vmatpush1.msra.mxu0 %v111
    %177 = vmatprep.subr.mxu0 0.0
    %178 = vmatpush1.msra.mxu0 %v112
    %179 = vmatprep.subr.mxu0 0.0
    %180 = vmatpush1.msra.mxu0 %v113
    %181 = vmatprep.subr.mxu0 0.0
    %182 = vmatpush1.msra.mxu0 %v114
    %183 = vmatprep.subr.mxu0 0.0
    %184 = vmatpush1.msra.mxu0 %v115
    %185 = vmatprep.subr.mxu0 0.0
    %186 = vmatpush1.msra.mxu0 %v116
    %187 = vmatprep.subr.mxu0 0.0
    %188 = vmatpush1.msra.mxu0 %v117
    %189 = vmatprep.mubr.f32.mxu0 %v85
    %190 = vmatmul.mubr.f32.gmra.mrb[0].mxu0 %v84
    %v191 = vpop.f32.mrb[0].mxu0
    %v192 = vadd.f32 %v123, %v191
    %v193 = vpop.f32.mrb[0].mxu0
    %194 = vdwg.mxu0
    %v195 = vtanh.pop %v192
    %196 = vst [vmem:[#allocation2] sm:$0xff] %v195
    %v197 = vld [vmem:[#allocation9] sm:$0xff]
    %v198 = vld [vmem:[#allocation9 + $0x8] sm:$0xff]
    %v199 = vld [vmem:[#allocation9 + $0x10] sm:$0xff]
    %v200 = vld [vmem:[#allocation9 + $0x18] sm:$0xff]
    %v201 = vld [vmem:[#allocation9 + $0x20] sm:$0xff]
    %v202 = vld [vmem:[#allocation9 + $0x28] sm:$0xff]
    %v203 = vld [vmem:[#allocation9 + $0x30] sm:$0xff]
    %v204 = vld [vmem:[#allocation9 + $0x38] sm:$0xff]
    %v205 = vld [vmem:[#allocation9 + $0x40] sm:$0xff]
    %v206 = vld [vmem:[#allocation9 + $0x48] sm:$0xff]
    %v207 = vld [vmem:[#allocation9 + $0x50] sm:$0xff]
    %v208 = vld [vmem:[#allocation9 + $0x58] sm:$0xff]
    %v209 = vld [vmem:[#allocation9 + $0x60] sm:$0xff]
    %v210 = vld [vmem:[#allocation9 + $0x68] sm:$0xff]
    %v211 = vld [vmem:[#allocation9 + $0x70] sm:$0xff]
    %v212 = vld [vmem:[#allocation9 + $0x78] sm:$0xff]
    %v213 = vld [vmem:[%s5] sm:$0x1]
    %v215 = vlaneseq
    %v216 = vshrl.u32 %v215, 7
    %v217 = vsub.s32 0, %v216
    %v218 = vrot.slane %v213, %v217
    %220 = vmatprep.subr.mxu0 0.0
    %221 = vmatpush1.msra.mxu0 %v197
    %222 = vmatprep.subr.mxu0 0.0
    %223 = vmatpush1.msra.mxu0 %v198
    %224 = vmatprep.subr.mxu0 0.0
    %225 = vmatpush1.msra.mxu0 %v199
    %226 = vmatprep.subr.mxu0 0.0
    %227 = vmatpush1.msra.mxu0 %v200
    %228 = vmatprep.subr.mxu0 0.0
    %229 = vmatpush1.msra.mxu0 %v201
    %230 = vmatprep.subr.mxu0 0.0
    %231 = vmatpush1.msra.mxu0 %v202
    %232 = vmatprep.subr.mxu0 0.0
    %233 = vmatpush1.msra.mxu0 %v203
    %234 = vmatprep.subr.mxu0 0.0
    %235 = vmatpush1.msra.mxu0 %v204
    %236 = vmatprep.subr.mxu0 0.0
    %237 = vmatpush1.msra.mxu0 %v205
    %238 = vmatprep.subr.mxu0 0.0
    %239 = vmatpush1.msra.mxu0 %v206
    %240 = vmatprep.subr.mxu0 0.0
    %241 = vmatpush1.msra.mxu0 %v207
    %242 = vmatprep.subr.mxu0 0.0
    %243 = vmatpush1.msra.mxu0 %v208
    %244 = vmatprep.subr.mxu0 0.0
    %245 = vmatpush1.msra.mxu0 %v209
    %246 = vmatprep.subr.mxu0 0.0
    %247 = vmatpush1.msra.mxu0 %v210
    %248 = vmatprep.subr.mxu0 0.0
    %249 = vmatpush1.msra.mxu0 %v211
    %250 = vmatprep.subr.mxu0 0.0
    %251 = vmatpush1.msra.mxu0 %v212
    %252 = vmatprep.subr.mxu0 0.0
    %253 = vmatpush1.msra.mxu0 0.0
    %254 = vmatprep.subr.mxu0 0.0
    %255 = vmatpush1.msra.mxu0 0.0
    %256 = vmatprep.subr.mxu0 0.0
    %257 = vmatpush1.msra.mxu0 0.0
    %258 = vmatprep.subr.mxu0 0.0
    %259 = vmatpush1.msra.mxu0 0.0
    %260 = vmatprep.subr.mxu0 0.0
    %261 = vmatpush1.msra.mxu0 0.0
    %262 = vmatprep.subr.mxu0 0.0
    %263 = vmatpush1.msra.mxu0 0.0
    %264 = vmatprep.subr.mxu0 0.0
    %265 = vmatpush1.msra.mxu0 0.0
    %266 = vmatprep.subr.mxu0 0.0
    %267 = vmatpush1.msra.mxu0 0.0
    %268 = vmatprep.subr.mxu0 0.0
    %269 = vmatpush1.msra.mxu0 0.0
    %270 = vmatprep.subr.mxu0 0.0
    %271 = vmatpush1.msra.mxu0 0.0
    %272 = vmatprep.subr.mxu0 0.0
    %273 = vmatpush1.msra.mxu0 0.0
    %274 = vmatprep.subr.mxu0 0.0
    %275 = vmatpush1.msra.mxu0 0.0
    %276 = vmatprep.subr.mxu0 0.0
    %277 = vmatpush1.msra.mxu0 0.0
    %278 = vmatprep.subr.mxu0 0.0
    %279 = vmatpush1.msra.mxu0 0.0
    %280 = vmatprep.subr.mxu0 0.0
    %281 = vmatpush1.msra.mxu0 0.0
    %282 = vmatprep.subr.mxu0 0.0
    %283 = vmatpush1.msra.mxu0 0.0
    %284 = vmatprep.mubr.f32.mxu0 0.0
    %285 = vmatmul.mubr.f32.gmra.mrb[0].mxu0 %v195
    %v286 = vpop.f32.mrb[0].mxu0
    %v287 = vadd.f32 %v218, %v286
    %v288 = vpop.f32.mrb[0].mxu0
    %289 = vdwg.mxu0
    %v290 = vlaneseq
    %v291 = vand.u32 %v290, 127
    %vm292 = vcmp.lt.s32.totalorder %v291, 16
    %v293 = vsel %vm292, %v287, -inf
    %294 = vmax.xlane.f32.xlu0 %v293
    %v295 = vpop.xlane.xlu0 %294
    %v296 = vsub.f32 %v287, %v295
    %v297 = vmul.f32 %v296, 1.442695
    %v298 = vpow.pop %v297
    %v299 = vsel %vm292, %v298, 0.0
    %300 = vadd.xlane.f32.xlu0 %v299
    %v301 = vpop.xlane.xlu0 %300
    %v302 = vlog2.pop %v301
    %v303 = vmul.f32 %v302, 0.6931472
    %v304 = vsub.f32 %v296, %v303
    %305 = vst [vmem:[#allocation11] sm:$0xff] %v304
    %306 = vst [vmem:[#allocation12] sm:$0xff] %v195
    // Predicated region
    $region46: #{tpu_custom_call.1} parent=1 // pred_check
      _
    $region47: #{tpu_custom_call.1} parent=1 // pred_check_branch
      %308 = sbr.rel (0) target = $region49
    $region48: #{tpu_custom_call.1} parent=1 // pred_region
      %s310 = ssub.s32 128, 128
      %311 = vsyncadd [#allocation5], %s310
      %s313 = sshll.u32 [#allocation11], 4
      %s314 = int_to_ptr.vmem [resolvable:$true] %s313
      %316 = dma.vmem_to_hbm [thread:$0]  %s314, 128, %s6, [#allocation5]
    $region49: #{tpu_custom_call.1} parent=1 // pred_fallthru
      _
    // Predicated region
    $region50: #{tpu_custom_call.1} parent=1 // pred_check
      _
    $region51: #{tpu_custom_call.1} parent=1 // pred_check_branch
      %318 = sbr.rel (0) target = $region53
    $region52: #{tpu_custom_call.1} parent=1 // pred_region
      %s320 = ssub.s32 128, 128
      %321 = vsyncadd [#allocation13], %s320
      %s323 = sshll.u32 [#allocation12], 4
      %s324 = int_to_ptr.vmem [resolvable:$true] %s323
      %326 = dma.vmem_to_hbm [thread:$0]  %s324, 128, %s7, [#allocation13]
    $region53: #{tpu_custom_call.1} parent=1 // pred_fallthru
      _
    // Predicated region
    $region54: #{tpu_custom_call.1} parent=1 // pred_check
      _
    $region55: #{tpu_custom_call.1} parent=1 // pred_check_branch
      %328 = sbr.rel (0) target = $region57
    $region56: #{tpu_custom_call.1} parent=1 // pred_region
      %329 = dma.done [#allocation5], 128
    $region57: #{tpu_custom_call.1} parent=1 // pred_fallthru
      _
    // Predicated region
    $region58: #{tpu_custom_call.1} parent=1 // pred_check
      _
    $region59: #{tpu_custom_call.1} parent=1 // pred_check_branch
      %331 = sbr.rel (0) target = $region61
    $region60: #{tpu_custom_call.1} parent=1 // pred_region
      %332 = dma.done [#allocation13], 128
    $region61: #{tpu_custom_call.1} parent=1 // pred_fallthru
      _
    %333 = vsyncpa [#allocation4], 1
    %334 = vsyncpa [#allocation7], 1
    %335 = vsyncpa [#allocation10], 1
    %336 = vsyncpa [#allocation5], 1
    %337 = vsyncpa [#allocation13], 1

</llo_original>
